<compile_context>
chip_gen: v6e
topology: v6e:2x2x1
jax: 0.10.0
libtpu: 0.0.40
codegen_flags: <defaults>
</compile_context>

<pallas_src>
import jax
import jax.numpy as jnp
from jax.experimental import pallas as pl
from jax.experimental.pallas import tpu as pltpu


# ---------------------------------------------------------------------------
# Shared in-kernel math
# ---------------------------------------------------------------------------
def _attend(q, k, w, mask, out_dtype):
    """q: (Bb, Lqb, D), k: (Bb, Lk, D), w: (D, D), mask: bool (Bb, Lqb, Lk) or None."""
    Bb, Lqb, D = q.shape

    # q @ w as a single wide matmul (Bb*Lqb rows -> good MXU fill),
    # f32 accumulation, result kept in the native input dtype for the next MXU op.
    qw = jnp.dot(q.reshape(Bb * Lqb, D), w, preferred_element_type=jnp.float32)
    qw = qw.astype(q.dtype).reshape(Bb, Lqb, D)

    # scores = q_w @ key^T   (batched, f32 accumulation)
    scores = jnp.einsum("bqd,bkd->bqk", qw, k,
                        preferred_element_type=jnp.float32)       # (Bb, Lqb, Lk)

    if mask is None:
        s_max = jnp.max(scores, axis=-1, keepdims=True)
        e = jnp.exp(scores - s_max)
        denom = jnp.sum(e, axis=-1, keepdims=True)
        attn = e * pl.reciprocal(denom, approx=True)
    else:
        scores = jnp.where(mask, -jnp.inf, scores)
        all_true = jnp.all(mask, axis=-1, keepdims=True)          # (Bb, Lqb, 1)
        s_max = jnp.max(scores, axis=-1, keepdims=True)
        s_max = jnp.where(all_true, 0.0, s_max)                   # avoid -inf - -inf
        e = jnp.exp(scores - s_max)
        denom = jnp.sum(e, axis=-1, keepdims=True)
        denom = jnp.where(all_true, 1.0, denom)                   # avoid 1/0
        attn = e * pl.reciprocal(denom, approx=True)
        attn = jnp.where(all_true, 0.0, attn)                     # torch.where path

    # output = attention_weights @ key (bf16-native MXU input, f32 accumulation)
    out = jnp.einsum("bqk,bkd->bqd", attn.astype(k.dtype), k,
                     preferred_element_type=jnp.float32)
    return out.astype(out_dtype)


def _kernel_nomask(q_ref, k_ref, w_ref, o_ref):
    o_ref[...] = _attend(q_ref[...], k_ref[...], w_ref[...], None, o_ref.dtype)


def _kernel_masked(q_ref, k_ref, w_ref, m_ref, o_ref):
    mask = m_ref[...] != 0
    o_ref[...] = _attend(q_ref[...], k_ref[...], w_ref[...], mask, o_ref.dtype)


# ---------------------------------------------------------------------------
# Block-size heuristics
# ---------------------------------------------------------------------------
def _pick_divisor(n, cap):
    """Largest divisor of n that is <= cap."""
    cap = int(max(1, min(n, cap)))
    for d in range(cap, 0, -1):
        if n % d == 0:
            return d
    return 1


def _pick_lq_block(lq, cap=512):
    """Full Lq if small; otherwise the largest 32-aligned divisor <= cap."""
    if lq <= cap:
        return lq
    d = (cap // 32) * 32
    while d >= 32:
        if lq % d == 0:
            return d
        d -= 32
    return lq  # fallback: no aligned divisor, take full rows


def _pick_batch_block(B, lq_b, Lk, D, itemsize, budget_bytes=6 * 1024 * 1024):
    """How many batch elements per grid step, sized to a modest VMEM budget."""
    per_b = (2 * lq_b * D + Lk * D) * itemsize     # query + output + key blocks
    per_b += lq_b * Lk                             # int8 mask block
    per_b += 4 * lq_b * Lk * 4                     # f32 scores/exp temporaries
    cap = max(1, budget_bytes // max(per_b, 1))
    return _pick_divisor(B, min(cap, 128))


# ---------------------------------------------------------------------------
# Public wrapper (Pallas equivalent of SimpleAttention.forward)
# ---------------------------------------------------------------------------
def simple_attention(query, key, w, queries_similarity_tensor=None):
    B, Lq, D = query.shape
    Bk, Lk, Dk = key.shape
    assert Bk == B and Dk == D and w.shape == (D, D)

    out_dtype = query.dtype
    itemsize = jnp.dtype(query.dtype).itemsize

    lq_b = _pick_lq_block(Lq)
    bb = _pick_batch_block(B, lq_b, Lk, D, itemsize)
    grid = (B // bb, Lq // lq_b)

    q_spec = pl.BlockSpec((bb, lq_b, D), lambda b, q: (b, q, 0))
    k_spec = pl.BlockSpec((bb, Lk, D), lambda b, q: (b, 0, 0))
    w_spec = pl.BlockSpec((D, D), lambda b, q: (0, 0))
    o_spec = pl.BlockSpec((bb, lq_b, D), lambda b, q: (b, q, 0))

    out_shape = jax.ShapeDtypeStruct((B, Lq, D), out_dtype)
    cparams = pltpu.CompilerParams(
        dimension_semantics=("parallel", "parallel"),
        vmem_limit_bytes=48 * 1024 * 1024,  # safe on v5e/v6e; <64 MiB v7x physical
    )

    if queries_similarity_tensor is None:
        # Dedicated variant: no dummy mask is materialized or DMA'd.
        return pl.pallas_call(
            _kernel_nomask,
            out_shape=out_shape,
            grid=grid,
            in_specs=[q_spec, k_spec, w_spec],
            out_specs=o_spec,
            compiler_params=cparams,
        )(query, key, w)

    mask = queries_similarity_tensor.astype(jnp.int8)  # 1 byte/elem HBM stream
    m_spec = pl.BlockSpec((bb, lq_b, Lk), lambda b, q: (b, q, 0))
    return pl.pallas_call(
        _kernel_masked,
        out_shape=out_shape,
        grid=grid,
        in_specs=[q_spec, k_spec, w_spec, m_spec],
        out_specs=o_spec,
        compiler_params=cparams,
    )(query, key, w, mask)


# ---------------------------------------------------------------------------
# Pure-JAX reference (mirrors the PyTorch module)
# ---------------------------------------------------------------------------
def _reference(query, key, w, mask=None):
    q_w = jnp.matmul(query, w)
    scores = jnp.matmul(q_w, jnp.swapaxes(key, -2, -1))
    if mask is not None:
        scores = jnp.where(mask, -jnp.inf, scores)
        all_true = jnp.all(mask, axis=-1, keepdims=True)
        attn = jax.nn.softmax(scores, axis=-1)
        attn = jnp.where(all_true, 0.0, attn)
    else:
        attn = jax.nn.softmax(scores, axis=-1)
    return jnp.matmul(attn, key)


if __name__ == "__main__":
    root = jax.random.PRNGKey(0)
    k_q, k_k, k_w, k_m = jax.random.split(root, 4)

    B, Lq, Lk, D = 2, 8, 8, 32  # query_dim = D

    query = jax.random.normal(k_q, (B, Lq, D), dtype=jnp.float32)
    key = jax.random.normal(k_k, (B, Lk, D), dtype=jnp.float32)
    w = jax.random.normal(k_w, (D, D), dtype=jnp.float32)

    # Tolerance is loosened slightly vs. exact because pl.reciprocal(approx=True)
    # has ~1e-3 relative error; real bugs would still be O(1) off.
    TOL = 5e-3

    # Path 1: no similarity mask (dedicated kernel variant, no mask DMA)
    out = simple_attention(query, key, w, None)
    jax.block_until_ready(out)
    ref = _reference(query, key, w, None)
    assert jnp.allclose(out, ref, atol=TOL, rtol=TOL), float(jnp.max(jnp.abs(out - ref)))

    # Path 2: boolean similarity mask, including a fully-masked row
    mask = jax.random.bernoulli(k_m, 0.3, (B, Lq, Lk))
    mask = mask.at[0, 0, :].set(True)  # force an all-True row
    out_m = simple_attention(query, key, w, mask)
    jax.block_until_ready(out_m)
    ref_m = _reference(query, key, w, mask)
    assert not jnp.any(jnp.isnan(out_m))
    assert jnp.allclose(out_m, ref_m, atol=TOL, rtol=TOL), float(jnp.max(jnp.abs(out_m - ref_m)))

    print("KERNEL_OK")
</pallas_src>

<mosaic_0001>
module attributes {stable_mosaic.version = 11 : i64} {
  func.func @_kernel_nomask(%arg0: i32, %arg1: i32, %arg2: memref<2x8x32xf32, #tpu.memory_space<vmem>>, %arg3: memref<2x8x32xf32, #tpu.memory_space<vmem>>, %arg4: memref<32x32xf32, #tpu.memory_space<vmem>>, %arg5: memref<2x8x32xf32, #tpu.memory_space<vmem>>) attributes {dimension_semantics = [#tpu.dimension_semantics<parallel>, #tpu.dimension_semantics<parallel>], iteration_bounds = array<i64: 1, 1>, scalar_prefetch = 0 : i64, scratch_operands = 0 : i64, tpu.core_type = #tpu.core_type<tc>, window_params = [{transform_indices = @transform_0, window_bounds = array<i64: 2, 8, 32>}, {transform_indices = @transform_1, window_bounds = array<i64: 2, 8, 32>}, {pipeline_mode = #tpu.pipeline_mode<synchronous>, transform_indices = @transform_2, window_bounds = array<i64: 32, 32>}, {transform_indices = @transform_3, window_bounds = array<i64: 2, 8, 32>}]} {
    %c0 = arith.constant 0 : index
    %c0_0 = arith.constant 0 : index
    %c0_1 = arith.constant 0 : index
    %0 = vector.load %arg2[%c0, %c0_0, %c0_1] : memref<2x8x32xf32, #tpu.memory_space<vmem>>, vector<2x8x32xf32>
    %c0_2 = arith.constant 0 : index
    %c0_3 = arith.constant 0 : index
    %c0_4 = arith.constant 0 : index
    %1 = vector.load %arg3[%c0_2, %c0_3, %c0_4] : memref<2x8x32xf32, #tpu.memory_space<vmem>>, vector<2x8x32xf32>
    %c0_5 = arith.constant 0 : index
    %c0_6 = arith.constant 0 : index
    %2 = vector.load %arg4[%c0_5, %c0_6] : memref<32x32xf32, #tpu.memory_space<vmem>>, vector<32x32xf32>
    %3 = vector.shape_cast %0 : vector<2x8x32xf32> to vector<16x32xf32>
    %cst = arith.constant dense<0.000000e+00> : vector<16x32xf32>
    %4 = tpu.matmul %3, %2, %cst {dimension_numbers = #tpu.dot_dimension_numbers<[1], [0], [0], [1], [0, 0, 1, 1], [], []>} : vector<16x32xf32>, vector<32x32xf32>, vector<16x32xf32> -> vector<16x32xf32>
    %5 = vector.shape_cast %4 : vector<16x32xf32> to vector<2x8x32xf32>
    "tpu.trace_start"() <{level = 10 : i32, message = "bqd,bkd->bqk"}> : () -> ()
    %cst_7 = arith.constant dense<0.000000e+00> : vector<2x8x8xf32>
    %6 = tpu.matmul %5, %1, %cst_7 {dimension_numbers = #tpu.dot_dimension_numbers<[2], [2], [1], [1], [0, 0, 0, 1, 1, 1], [0], [0]>} : vector<2x8x32xf32>, vector<2x8x32xf32>, vector<2x8x8xf32> -> vector<2x8x8xf32>
    "tpu.trace_stop"() : () -> ()
    %cst_8 = arith.constant dense<0xFF800000> : vector<2x8xf32>
    %7 = vector.multi_reduction <maximumf>, %6, %cst_8 [2] : vector<2x8x8xf32> to vector<2x8xf32>
    %8 = vector.shape_cast %7 : vector<2x8xf32> to vector<2x8x1xf32>
    %9 = vector.broadcast %8 : vector<2x8x1xf32> to vector<2x8x8xf32>
    %10 = arith.subf %6, %9 : vector<2x8x8xf32>
    %11 = math.exp %10 : vector<2x8x8xf32>
    %cst_9 = arith.constant dense<0.000000e+00> : vector<2x8xf32>
    %12 = vector.multi_reduction <add>, %11, %cst_9 [2] : vector<2x8x8xf32> to vector<2x8xf32>
    %13 = vector.shape_cast %12 : vector<2x8xf32> to vector<2x8x1xf32>
    %14 = tpu.reciprocal %13 {approx = true} : vector<2x8x1xf32> -> vector<2x8x1xf32>
    %15 = vector.broadcast %14 : vector<2x8x1xf32> to vector<2x8x8xf32>
    %16 = arith.mulf %11, %15 : vector<2x8x8xf32>
    "tpu.trace_start"() <{level = 10 : i32, message = "bqk,bkd->bqd"}> : () -> ()
    %cst_10 = arith.constant dense<0.000000e+00> : vector<2x8x32xf32>
    %17 = tpu.matmul %16, %1, %cst_10 {dimension_numbers = #tpu.dot_dimension_numbers<[2], [1], [1], [2], [0, 0, 0, 1, 1, 2], [0], [0]>} : vector<2x8x8xf32>, vector<2x8x32xf32>, vector<2x8x32xf32> -> vector<2x8x32xf32>
    "tpu.trace_stop"() : () -> ()
    %c0_11 = arith.constant 0 : index
    %c0_12 = arith.constant 0 : index
    %c0_13 = arith.constant 0 : index
    %18 = vector.load %arg5[%c0_11, %c0_12, %c0_13] : memref<2x8x32xf32, #tpu.memory_space<vmem>>, vector<2x8x32xf32>
    tpu.vector_store %arg5[%c0_11, %c0_12, %c0_13], %17 {strides = array<i32>} : memref<2x8x32xf32, #tpu.memory_space<vmem>>, vector<2x8x32xf32>,
    return
  }
  func.func @transform_0(%arg0: i32, %arg1: i32) -> (i32, i32, i32) {
    %c0_i32 = arith.constant 0 : i32
    %c0_i32_0 = arith.constant 0 : i32
    return %arg0, %arg1, %c0_i32 : i32, i32, i32
  }
  func.func @transform_1(%arg0: i32, %arg1: i32) -> (i32, i32, i32) {
    %c0_i32 = arith.constant 0 : i32
    %c0_i32_0 = arith.constant 0 : i32
    %c0_i32_1 = arith.constant 0 : i32
    return %arg0, %c0_i32, %c0_i32_0 : i32, i32, i32
  }
  func.func @transform_2(%arg0: i32, %arg1: i32) -> (i32, i32) {
    %c0_i32 = arith.constant 0 : i32
    %c0_i32_0 = arith.constant 0 : i32
    %c0_i32_1 = arith.constant 0 : i32
    return %c0_i32, %c0_i32_0 : i32, i32
  }
  func.func @transform_3(%arg0: i32, %arg1: i32) -> (i32, i32, i32) {
    %c0_i32 = arith.constant 0 : i32
    %c0_i32_0 = arith.constant 0 : i32
    return %arg0, %arg1, %c0_i32 : i32, i32, i32
  }
}

</mosaic_0001>

<llo_original>
// kernel: tpu_custom_call.1
$region0: #{tpu_custom_call.1}
  #allocation0 [shape = 'u32[]', space=smem, size = 0x4, offset = 0x4, fixed_abs, tag = 'smem constant byte address 0x4 - core index']
  #allocation1 [shape = 'u32[144,128]{1,0:T(1,128)}', space=vmem, size = 0x12000, scoped, tag = 'internal scratch']
  %s0 = inlined_call_operand.hbm [shape: f32[2,8,32], index: 0, kind: input, shape index: {}]
  %s1 = inlined_call_operand.hbm [shape: f32[2,8,32], index: 1, kind: input, shape index: {}]
  %s2 = inlined_call_operand.hbm [shape: f32[32,32], index: 2, kind: input, shape index: {}]
  %s3 = inlined_call_operand.hbm [shape: f32[2,8,32], index: 3, kind: output, shape index: {}]
  %s4 = sld [smem:[#allocation0]]
  $region34: #{tpu_custom_call.1} parent=0
    _
  %s6 = ssub.s32 1, %s4
  %s7 = scalar_select 0, %s6, %s4
  $region1: #{tpu_custom_call.1} parent=0
    #allocation2 [shape = 'u8[8192]{0}', space=vmem, size = 0x2000, scoped, tag = 'input window, operand 0, single buffered']
    #allocation3 [shape = 's32[1]{0}', space=sflag, size = 0x4, scoped, tag = 'scoped memory for tpu_custom_call.1']
    #allocation4 [shape = 's32[1]{0}', space=sflag, size = 0x4, scoped, tag = 'scoped memory for tpu_custom_call.1']
    #allocation5 [shape = 'u8[8192]{0}', space=vmem, size = 0x2000, scoped, tag = 'input window, operand 1, single buffered']
    #allocation6 [shape = 's32[1]{0}', space=sflag, size = 0x4, scoped, tag = 'scoped memory for tpu_custom_call.1']
    #allocation7 [shape = 'u8[16384]{0}', space=vmem, size = 0x4000, scoped, tag = 'input window, operand 2, single buffered']
    #allocation8 [shape = 'u8[8192]{0}', space=vmem, size = 0x2000, scoped, tag = 'output window, operand 0, single buffered']
    %8 = vsyncpa [#allocation3], 0
    %9 = vsyncpa [#allocation6], 0
    %10 = vsyncpa [#allocation4], 0
    // Predicated region
    $region2: #{tpu_custom_call.1} parent=1 // pred_check
      _
    $region3: #{tpu_custom_call.1} parent=1 // pred_check_branch
      %12 = sbr.rel (0) target = $region5
    $region4: #{tpu_custom_call.1} parent=1 // pred_region
      %s14 = ssub.s32 256, 256
      %15 = vsyncadd [#allocation3], %s14
      %s16 = sshll.u32 [#allocation2], 4
      %s17 = int_to_ptr.vmem [resolvable:$true] %s16
      %22 = dma.hbm_to_vmem [thread:$0]  %s0, 256, %s17, [#allocation3], 128, 128, 8
    $region5: #{tpu_custom_call.1} parent=1 // pred_fallthru
      _
    // Predicated region
    $region6: #{tpu_custom_call.1} parent=1 // pred_check
      _
    $region7: #{tpu_custom_call.1} parent=1 // pred_check_branch
      %24 = sbr.rel (0) target = $region9
    $region8: #{tpu_custom_call.1} parent=1 // pred_region
      %s26 = ssub.s32 256, 256
      %27 = vsyncadd [#allocation6], %s26
      %s28 = sshll.u32 [#allocation5], 4
      %s29 = int_to_ptr.vmem [resolvable:$true] %s28
      %34 = dma.hbm_to_vmem [thread:$0]  %s1, 256, %s29, [#allocation6], 128, 128, 8
    $region9: #{tpu_custom_call.1} parent=1 // pred_fallthru
      _
    // Predicated region
    $region10: #{tpu_custom_call.1} parent=1 // pred_check
      _
    $region11: #{tpu_custom_call.1} parent=1 // pred_check_branch
      %36 = sbr.rel (0) target = $region13
    $region12: #{tpu_custom_call.1} parent=1 // pred_region
      %s38 = ssub.s32 512, 512
      %39 = vsyncadd [#allocation6], %s38
      %s40 = sshll.u32 [#allocation7], 4
      %s41 = int_to_ptr.vmem [resolvable:$true] %s40
      %46 = dma.hbm_to_vmem [thread:$0]  %s2, 512, %s41, [#allocation6], 128, 128, 8
    $region13: #{tpu_custom_call.1} parent=1 // pred_fallthru
      _
    // Predicated region
    $region14: #{tpu_custom_call.1} parent=1 // pred_check
      _
    $region15: #{tpu_custom_call.1} parent=1 // pred_check_branch
      %48 = sbr.rel (0) target = $region17
    $region16: #{tpu_custom_call.1} parent=1 // pred_region
      %49 = dma.done [#allocation3], 256
    $region17: #{tpu_custom_call.1} parent=1 // pred_fallthru
      _
    // Predicated region
    $region18: #{tpu_custom_call.1} parent=1 // pred_check
      _
    $region19: #{tpu_custom_call.1} parent=1 // pred_check_branch
      %51 = sbr.rel (0) target = $region21
    $region20: #{tpu_custom_call.1} parent=1 // pred_region
      %52 = dma.done [#allocation6], 256
    $region21: #{tpu_custom_call.1} parent=1 // pred_fallthru
      _
    // Predicated region
    $region22: #{tpu_custom_call.1} parent=1 // pred_check
      _
    $region23: #{tpu_custom_call.1} parent=1 // pred_check_branch
      %54 = sbr.rel (0) target = $region25
    $region24: #{tpu_custom_call.1} parent=1 // pred_region
      %55 = dma.done [#allocation6], 512
    $region25: #{tpu_custom_call.1} parent=1 // pred_fallthru
      _
    %v56 = vld [vmem:[#allocation2] sm:$0xff]
    %v57 = vld [vmem:[#allocation2 + $0x8] sm:$0xff]
    %v58 = vld [vmem:[#allocation5] sm:$0xff]
    %v59 = vld [vmem:[#allocation5 + $0x8] sm:$0xff]
    %v60 = vld [vmem:[#allocation7] sm:$0xff]
    %v61 = vld [vmem:[#allocation7 + $0x8] sm:$0xff]
    %v62 = vld [vmem:[#allocation7 + $0x10] sm:$0xff]
    %v63 = vld [vmem:[#allocation7 + $0x18] sm:$0xff]
    %vm64 = vcmask 261120
    %v66 = vsel %vm64, %v56, 0
    %v69 = vsel %vm64, %v57, 0
    %71 = vmatprep.subr.mxu0 0.0
    %72 = vmatpush1.msra.mxu0 0.0
    %73 = vmatprep.subr.mxu0 0.0
    %74 = vmatpush1.msra.mxu0 0.0
    %75 = vmatprep.subr.mxu0 0.0
    %76 = vmatpush1.msra.mxu0 0.0
    %77 = vmatprep.subr.mxu0 0.0
    %78 = vmatpush1.msra.mxu0 0.0
    %79 = vmatprep.subr.mxu0 0.0
    %80 = vmatpush1.msra.mxu0 0.0
    %81 = vmatprep.subr.mxu0 0.0
    %82 = vmatpush1.msra.mxu0 0.0
    %83 = vmatprep.subr.mxu0 0.0
    %84 = vmatpush1.msra.mxu0 0.0
    %85 = vmatprep.subr.mxu0 0.0
    %86 = vmatpush1.msra.mxu0 0.0
    %87 = vmatprep.subr.mxu0 0.0
    %88 = vmatpush1.msra.mxu0 0.0
    %89 = vmatprep.subr.mxu0 0.0
    %90 = vmatpush1.msra.mxu0 0.0
    %91 = vmatprep.subr.mxu0 0.0
    %92 = vmatpush1.msra.mxu0 0.0
    %93 = vmatprep.subr.mxu0 0.0
    %94 = vmatpush1.msra.mxu0 0.0
    %95 = vmatprep.subr.mxu0 0.0
    %96 = vmatpush1.msra.mxu0 %v63
    %97 = vmatprep.subr.mxu0 0.0
    %98 = vmatpush1.msra.mxu0 %v62
    %99 = vmatprep.subr.mxu0 0.0
    %100 = vmatpush1.msra.mxu0 %v61
    %101 = vmatprep.subr.mxu0 0.0
    %102 = vmatpush1.msra.mxu0 %v60
    %103 = vmatprep.subr.mxu0 0.0
    %104 = vmatpush2.msra.mxu0 0.0
    %105 = vmatprep.subr.mxu0 0.0
    %106 = vmatpush2.msra.mxu0 0.0
    %107 = vmatprep.subr.mxu0 0.0
    %108 = vmatpush2.msra.mxu0 0.0
    %109 = vmatprep.subr.mxu0 0.0
    %110 = vmatpush2.msra.mxu0 0.0
    %111 = vmatprep.subr.mxu0 0.0
    %112 = vmatpush2.msra.mxu0 0.0
    %113 = vmatprep.subr.mxu0 0.0
    %114 = vmatpush2.msra.mxu0 0.0
    %115 = vmatprep.subr.mxu0 0.0
    %116 = vmatpush2.msra.mxu0 0.0
    %117 = vmatprep.subr.mxu0 0.0
    %118 = vmatpush2.msra.mxu0 0.0
    %119 = vmatprep.subr.mxu0 0.0
    %120 = vmatpush2.msra.mxu0 0.0
    %121 = vmatprep.subr.mxu0 0.0
    %122 = vmatpush2.msra.mxu0 0.0
    %123 = vmatprep.subr.mxu0 0.0
    %124 = vmatpush2.msra.mxu0 0.0
    %125 = vmatprep.subr.mxu0 0.0
    %126 = vmatpush2.msra.mxu0 0.0
    %127 = vmatprep.subr.mxu0 0.0
    %128 = vmatpush2.msra.mxu0 0.0
    %129 = vmatprep.subr.mxu0 0.0
    %130 = vmatpush2.msra.mxu0 0.0
    %131 = vmatprep.subr.mxu0 0.0
    %132 = vmatpush2.msra.mxu0 0.0
    %133 = vmatprep.subr.mxu0 0.0
    %134 = vmatpush2.msra.mxu0 0.0
    %135 = vmatprep.mubr.f32.mxu0 0.0
    %136 = vmatmul.mubr.f32.gmra.mxu0 %v66
    %v137 = vpop.f32.mrf.mxu0
    %v138 = vadd.f32 0.0, %v137
    %v139 = vpop.f32.mrf.mxu0
    %140 = vmatprep.mubr.f32.mxu0 0.0
    %141 = vmatmul.mubr.f32.gmra.mxu0 %v69
    %v142 = vpop.f32.mrf.mxu0
    %v143 = vadd.f32 0.0, %v142
    %v144 = vpop.f32.mrf.mxu0
    %145 = vdwg.mxu0
    %v147 = vsel %vm64, %v138, 0
    %v150 = vsel %vm64, %v58, 0
    %152 = vmatprep.subr.mxu0 0.0
    %153 = vmatpush1.xpose.msra.mxu0 0.0
    %154 = vmatprep.subr.mxu0 0.0
    %155 = vmatpush1.xpose.msra.mxu0 0.0
    %156 = vmatprep.subr.mxu0 0.0
    %157 = vmatpush1.xpose.msra.mxu0 0.0
    %158 = vmatprep.subr.mxu0 0.0
    %159 = vmatpush1.xpose.msra.mxu0 0.0
    %160 = vmatprep.subr.mxu0 0.0
    %161 = vmatpush1.xpose.msra.mxu0 0.0
    %162 = vmatprep.subr.mxu0 0.0
    %163 = vmatpush1.xpose.msra.mxu0 0.0
    %164 = vmatprep.subr.mxu0 0.0
    %165 = vmatpush1.xpose.msra.mxu0 0.0
    %166 = vmatprep.subr.mxu0 0.0
    %167 = vmatpush1.xpose.msra.mxu0 0.0
    %168 = vmatprep.subr.mxu0 0.0
    %169 = vmatpush1.xpose.msra.mxu0 0.0
    %170 = vmatprep.subr.mxu0 0.0
    %171 = vmatpush1.xpose.msra.mxu0 0.0
    %172 = vmatprep.subr.mxu0 0.0
    %173 = vmatpush1.xpose.msra.mxu0 0.0
    %174 = vmatprep.subr.mxu0 0.0
    %175 = vmatpush1.xpose.msra.mxu0 0.0
    %176 = vmatprep.subr.mxu0 0.0
    %177 = vmatpush1.xpose.msra.mxu0 0.0
    %178 = vmatprep.subr.mxu0 0.0
    %179 = vmatpush1.xpose.msra.mxu0 0.0
    %180 = vmatprep.subr.mxu0 0.0
    %181 = vmatpush1.xpose.msra.mxu0 0.0
    %182 = vmatprep.subr.mxu0 0.0
    %183 = vmatpush1.xpose.msra.mxu0 %v150
    %184 = vmatprep.subr.mxu0 0.0
    %185 = vmatpush2.xpose.msra.mxu0 0.0
    %186 = vmatprep.subr.mxu0 0.0
    %187 = vmatpush2.xpose.msra.mxu0 0.0
    %188 = vmatprep.subr.mxu0 0.0
    %189 = vmatpush2.xpose.msra.mxu0 0.0
    %190 = vmatprep.subr.mxu0 0.0
    %191 = vmatpush2.xpose.msra.mxu0 0.0
    %192 = vmatprep.subr.mxu0 0.0
    %193 = vmatpush2.xpose.msra.mxu0 0.0
    %194 = vmatprep.subr.mxu0 0.0
    %195 = vmatpush2.xpose.msra.mxu0 0.0
    %196 = vmatprep.subr.mxu0 0.0
    %197 = vmatpush2.xpose.msra.mxu0 0.0
    %198 = vmatprep.subr.mxu0 0.0
    %199 = vmatpush2.xpose.msra.mxu0 0.0
    %200 = vmatprep.subr.mxu0 0.0
    %201 = vmatpush2.xpose.msra.mxu0 0.0
    %202 = vmatprep.subr.mxu0 0.0
    %203 = vmatpush2.xpose.msra.mxu0 0.0
    %204 = vmatprep.subr.mxu0 0.0
    %205 = vmatpush2.xpose.msra.mxu0 0.0
    %206 = vmatprep.subr.mxu0 0.0
    %207 = vmatpush2.xpose.msra.mxu0 0.0
    %208 = vmatprep.subr.mxu0 0.0
    %209 = vmatpush2.xpose.msra.mxu0 0.0
    %210 = vmatprep.subr.mxu0 0.0
    %211 = vmatpush2.xpose.msra.mxu0 0.0
    %212 = vmatprep.subr.mxu0 0.0
    %213 = vmatpush2.xpose.msra.mxu0 0.0
    %214 = vmatprep.subr.mxu0 0.0
    %215 = vmatpush2.xpose.msra.mxu0 0.0
    %216 = vmatprep.mubr.f32.mxu0 0.0
    %217 = vmatmul.mubr.f32.gmra.mxu0 %v147
    %v218 = vpop.f32.mrf.mxu0
    %v219 = vadd.f32 0.0, %v218
    %v220 = vpop.f32.mrf.mxu0
    %221 = vdwg.mxu0
    %v223 = vsel %vm64, %v143, 0
    %v226 = vsel %vm64, %v59, 0
    %228 = vmatprep.subr.mxu0 0.0
    %229 = vmatpush1.xpose.msra.mxu0 0.0
    %230 = vmatprep.subr.mxu0 0.0
    %231 = vmatpush1.xpose.msra.mxu0 0.0
    %232 = vmatprep.subr.mxu0 0.0
    %233 = vmatpush1.xpose.msra.mxu0 0.0
    %234 = vmatprep.subr.mxu0 0.0
    %235 = vmatpush1.xpose.msra.mxu0 0.0
    %236 = vmatprep.subr.mxu0 0.0
    %237 = vmatpush1.xpose.msra.mxu0 0.0
    %238 = vmatprep.subr.mxu0 0.0
    %239 = vmatpush1.xpose.msra.mxu0 0.0
    %240 = vmatprep.subr.mxu0 0.0
    %241 = vmatpush1.xpose.msra.mxu0 0.0
    %242 = vmatprep.subr.mxu0 0.0
    %243 = vmatpush1.xpose.msra.mxu0 0.0
    %244 = vmatprep.subr.mxu0 0.0
    %245 = vmatpush1.xpose.msra.mxu0 0.0
    %246 = vmatprep.subr.mxu0 0.0
    %247 = vmatpush1.xpose.msra.mxu0 0.0
    %248 = vmatprep.subr.mxu0 0.0
    %249 = vmatpush1.xpose.msra.mxu0 0.0
    %250 = vmatprep.subr.mxu0 0.0
    %251 = vmatpush1.xpose.msra.mxu0 0.0
    %252 = vmatprep.subr.mxu0 0.0
    %253 = vmatpush1.xpose.msra.mxu0 0.0
    %254 = vmatprep.subr.mxu0 0.0
    %255 = vmatpush1.xpose.msra.mxu0 0.0
    %256 = vmatprep.subr.mxu0 0.0
    %257 = vmatpush1.xpose.msra.mxu0 0.0
    %258 = vmatprep.subr.mxu0 0.0
    %259 = vmatpush1.xpose.msra.mxu0 %v226
    %260 = vmatprep.subr.mxu0 0.0
    %261 = vmatpush2.xpose.msra.mxu0 0.0
    %262 = vmatprep.subr.mxu0 0.0
    %263 = vmatpush2.xpose.msra.mxu0 0.0
    %264 = vmatprep.subr.mxu0 0.0
    %265 = vmatpush2.xpose.msra.mxu0 0.0
    %266 = vmatprep.subr.mxu0 0.0
    %267 = vmatpush2.xpose.msra.mxu0 0.0
    %268 = vmatprep.subr.mxu0 0.0
    %269 = vmatpush2.xpose.msra.mxu0 0.0
    %270 = vmatprep.subr.mxu0 0.0
    %271 = vmatpush2.xpose.msra.mxu0 0.0
    %272 = vmatprep.subr.mxu0 0.0
    %273 = vmatpush2.xpose.msra.mxu0 0.0
    %274 = vmatprep.subr.mxu0 0.0
    %275 = vmatpush2.xpose.msra.mxu0 0.0
    %276 = vmatprep.subr.mxu0 0.0
    %277 = vmatpush2.xpose.msra.mxu0 0.0
    %278 = vmatprep.subr.mxu0 0.0
    %279 = vmatpush2.xpose.msra.mxu0 0.0
    %280 = vmatprep.subr.mxu0 0.0
    %281 = vmatpush2.xpose.msra.mxu0 0.0
    %282 = vmatprep.subr.mxu0 0.0
    %283 = vmatpush2.xpose.msra.mxu0 0.0
    %284 = vmatprep.subr.mxu0 0.0
    %285 = vmatpush2.xpose.msra.mxu0 0.0
    %286 = vmatprep.subr.mxu0 0.0
    %287 = vmatpush2.xpose.msra.mxu0 0.0
    %288 = vmatprep.subr.mxu0 0.0
    %289 = vmatpush2.xpose.msra.mxu0 0.0
    %290 = vmatprep.subr.mxu0 0.0
    %291 = vmatpush2.xpose.msra.mxu0 0.0
    %292 = vmatprep.mubr.f32.mxu0 0.0
    %293 = vmatmul.mubr.f32.gmra.mxu0 %v223
    %v294 = vpop.f32.mrf.mxu0
    %v295 = vadd.f32 0.0, %v294
    %v296 = vpop.f32.mrf.mxu0
    %297 = vdwg.mxu0
    %vm298 = vcmask 64512
    %v299 = vsel %vm298, %v219, -inf
    %300 = vmax.xlane.f32.xlu0 %v299
    %v301 = vpop.xlane.xlu0 %300
    %v302 = vsel %vm298, %v295, -inf
    %303 = vmax.xlane.f32.xlu0 %v302
    %v304 = vpop.xlane.xlu0 %303
    %v305 = vsub.f32 %v219, %v301
    %v306 = vsub.f32 %v295, %v304
    %v307 = vmul.f32 %v305, 1.442695
    %v308 = vpow.pop %v307
    %v309 = vmul.f32 %v306, 1.442695
    %v310 = vpow.pop %v309
    %v311 = vsel %vm298, %v308, 0.0
    %312 = vadd.xlane.f32.xlu0 %v311
    %v313 = vpop.xlane.xlu0 %312
    %v314 = vsel %vm298, %v310, 0.0
    %315 = vadd.xlane.f32.xlu0 %v314
    %v316 = vpop.xlane.xlu0 %315
    %v317 = vrcp.pop %v313
    %v318 = vrcp.pop %v316
    %v319 = vmul.f32 %v308, %v317
    %v320 = vmul.f32 %v310, %v318
    %v322 = vsel %vm298, %v319, 0
    %324 = vmatprep.subr.mxu0 0.0
    %325 = vmatpush1.msra.mxu0 0.0
    %326 = vmatprep.subr.mxu0 0.0
    %327 = vmatpush1.msra.mxu0 0.0
    %328 = vmatprep.subr.mxu0 0.0
    %329 = vmatpush1.msra.mxu0 0.0
    %330 = vmatprep.subr.mxu0 0.0
    %331 = vmatpush1.msra.mxu0 0.0
    %332 = vmatprep.subr.mxu0 0.0
    %333 = vmatpush1.msra.mxu0 0.0
    %334 = vmatprep.subr.mxu0 0.0
    %335 = vmatpush1.msra.mxu0 0.0
    %336 = vmatprep.subr.mxu0 0.0
    %337 = vmatpush1.msra.mxu0 0.0
    %338 = vmatprep.subr.mxu0 0.0
    %339 = vmatpush1.msra.mxu0 0.0
    %340 = vmatprep.subr.mxu0 0.0
    %341 = vmatpush1.msra.mxu0 0.0
    %342 = vmatprep.subr.mxu0 0.0
    %343 = vmatpush1.msra.mxu0 0.0
    %344 = vmatprep.subr.mxu0 0.0
    %345 = vmatpush1.msra.mxu0 0.0
    %346 = vmatprep.subr.mxu0 0.0
    %347 = vmatpush1.msra.mxu0 0.0
    %348 = vmatprep.subr.mxu0 0.0
    %349 = vmatpush1.msra.mxu0 0.0
    %350 = vmatprep.subr.mxu0 0.0
    %351 = vmatpush1.msra.mxu0 0.0
    %352 = vmatprep.subr.mxu0 0.0
    %353 = vmatpush1.msra.mxu0 0.0
    %354 = vmatprep.subr.mxu0 0.0
    %355 = vmatpush1.msra.mxu0 %v58
    %356 = vmatprep.subr.mxu0 0.0
    %357 = vmatpush2.msra.mxu0 0.0
    %358 = vmatprep.subr.mxu0 0.0
    %359 = vmatpush2.msra.mxu0 0.0
    %360 = vmatprep.subr.mxu0 0.0
    %361 = vmatpush2.msra.mxu0 0.0
    %362 = vmatprep.subr.mxu0 0.0
    %363 = vmatpush2.msra.mxu0 0.0
    %364 = vmatprep.subr.mxu0 0.0
    %365 = vmatpush2.msra.mxu0 0.0
    %366 = vmatprep.subr.mxu0 0.0
    %367 = vmatpush2.msra.mxu0 0.0
    %368 = vmatprep.subr.mxu0 0.0
    %369 = vmatpush2.msra.mxu0 0.0
    %370 = vmatprep.subr.mxu0 0.0
    %371 = vmatpush2.msra.mxu0 0.0
    %372 = vmatprep.subr.mxu0 0.0
    %373 = vmatpush2.msra.mxu0 0.0
    %374 = vmatprep.subr.mxu0 0.0
    %375 = vmatpush2.msra.mxu0 0.0
    %376 = vmatprep.subr.mxu0 0.0
    %377 = vmatpush2.msra.mxu0 0.0
    %378 = vmatprep.subr.mxu0 0.0
    %379 = vmatpush2.msra.mxu0 0.0
    %380 = vmatprep.subr.mxu0 0.0
    %381 = vmatpush2.msra.mxu0 0.0
    %382 = vmatprep.subr.mxu0 0.0
    %383 = vmatpush2.msra.mxu0 0.0
    %384 = vmatprep.subr.mxu0 0.0
    %385 = vmatpush2.msra.mxu0 0.0
    %386 = vmatprep.subr.mxu0 0.0
    %387 = vmatpush2.msra.mxu0 0.0
    %388 = vmatprep.mubr.f32.mxu0 0.0
    %389 = vmatmul.mubr.f32.gmra.mxu0 %v322
    %v390 = vpop.f32.mrf.mxu0
    %v391 = vadd.f32 0.0, %v390
    %v392 = vpop.f32.mrf.mxu0
    %393 = vdwg.mxu0
    %v395 = vsel %vm298, %v320, 0
    %397 = vmatprep.subr.mxu0 0.0
    %398 = vmatpush1.msra.mxu0 0.0
    %399 = vmatprep.subr.mxu0 0.0
    %400 = vmatpush1.msra.mxu0 0.0
    %401 = vmatprep.subr.mxu0 0.0
    %402 = vmatpush1.msra.mxu0 0.0
    %403 = vmatprep.subr.mxu0 0.0
    %404 = vmatpush1.msra.mxu0 0.0
    %405 = vmatprep.subr.mxu0 0.0
    %406 = vmatpush1.msra.mxu0 0.0
    %407 = vmatprep.subr.mxu0 0.0
    %408 = vmatpush1.msra.mxu0 0.0
    %409 = vmatprep.subr.mxu0 0.0
    %410 = vmatpush1.msra.mxu0 0.0
    %411 = vmatprep.subr.mxu0 0.0
    %412 = vmatpush1.msra.mxu0 0.0
    %413 = vmatprep.subr.mxu0 0.0
    %414 = vmatpush1.msra.mxu0 0.0
    %415 = vmatprep.subr.mxu0 0.0
    %416 = vmatpush1.msra.mxu0 0.0
    %417 = vmatprep.subr.mxu0 0.0
    %418 = vmatpush1.msra.mxu0 0.0
    %419 = vmatprep.subr.mxu0 0.0
    %420 = vmatpush1.msra.mxu0 0.0
    %421 = vmatprep.subr.mxu0 0.0
    %422 = vmatpush1.msra.mxu0 0.0
    %423 = vmatprep.subr.mxu0 0.0
    %424 = vmatpush1.msra.mxu0 0.0
    %425 = vmatprep.subr.mxu0 0.0
    %426 = vmatpush1.msra.mxu0 0.0
    %427 = vmatprep.subr.mxu0 0.0
    %428 = vmatpush1.msra.mxu0 %v59
    %429 = vmatprep.subr.mxu0 0.0
    %430 = vmatpush2.msra.mxu0 0.0
    %431 = vmatprep.subr.mxu0 0.0
    %432 = vmatpush2.msra.mxu0 0.0
    %433 = vmatprep.subr.mxu0 0.0
    %434 = vmatpush2.msra.mxu0 0.0
    %435 = vmatprep.subr.mxu0 0.0
    %436 = vmatpush2.msra.mxu0 0.0
    %437 = vmatprep.subr.mxu0 0.0
    %438 = vmatpush2.msra.mxu0 0.0
    %439 = vmatprep.subr.mxu0 0.0
    %440 = vmatpush2.msra.mxu0 0.0
    %441 = vmatprep.subr.mxu0 0.0
    %442 = vmatpush2.msra.mxu0 0.0
    %443 = vmatprep.subr.mxu0 0.0
    %444 = vmatpush2.msra.mxu0 0.0
    %445 = vmatprep.subr.mxu0 0.0
    %446 = vmatpush2.msra.mxu0 0.0
    %447 = vmatprep.subr.mxu0 0.0
    %448 = vmatpush2.msra.mxu0 0.0
    %449 = vmatprep.subr.mxu0 0.0
    %450 = vmatpush2.msra.mxu0 0.0
    %451 = vmatprep.subr.mxu0 0.0
    %452 = vmatpush2.msra.mxu0 0.0
    %453 = vmatprep.subr.mxu0 0.0
    %454 = vmatpush2.msra.mxu0 0.0
    %455 = vmatprep.subr.mxu0 0.0
    %456 = vmatpush2.msra.mxu0 0.0
    %457 = vmatprep.subr.mxu0 0.0
    %458 = vmatpush2.msra.mxu0 0.0
    %459 = vmatprep.subr.mxu0 0.0
    %460 = vmatpush2.msra.mxu0 0.0
    %461 = vmatprep.mubr.f32.mxu0 0.0
    %462 = vmatmul.mubr.f32.gmra.mxu0 %v395
    %v463 = vpop.f32.mrf.mxu0
    %v464 = vadd.f32 0.0, %v463
    %v465 = vpop.f32.mrf.mxu0
    %466 = vdwg.mxu0
    %467 = vst.msk [vmem:[#allocation8] sm:$0xff] %vm64, %v391
    %468 = vst.msk [vmem:[#allocation8 + $0x8] sm:$0xff] %vm64, %v464
    // Predicated region
    $region26: #{tpu_custom_call.1} parent=1 // pred_check
      _
    $region27: #{tpu_custom_call.1} parent=1 // pred_check_branch
      %470 = sbr.rel (0) target = $region29
    $region28: #{tpu_custom_call.1} parent=1 // pred_region
      %s472 = ssub.s32 256, 256
      %473 = vsyncadd [#allocation4], %s472
      %s474 = sshll.u32 [#allocation8], 4
      %s475 = int_to_ptr.vmem [resolvable:$true] %s474
      %480 = dma.vmem_to_hbm [thread:$0]  %s475, 256, %s3, [#allocation4], 128, 128, 8
    $region29: #{tpu_custom_call.1} parent=1 // pred_fallthru
      _
    // Predicated region
    $region30: #{tpu_custom_call.1} parent=1 // pred_check
      _
    $region31: #{tpu_custom_call.1} parent=1 // pred_check_branch
      %482 = sbr.rel (0) target = $region33
    $region32: #{tpu_custom_call.1} parent=1 // pred_region
      %483 = dma.done [#allocation4], 256
    $region33: #{tpu_custom_call.1} parent=1 // pred_fallthru
      _
    %484 = vsyncpa [#allocation3], 1
    %485 = vsyncpa [#allocation6], 1
    %486 = vsyncpa [#allocation4], 1

</llo_original>
